<compile_context>
chip_gen: v7x
topology: tpu7x:2x2x1
jax: 0.10.0
libtpu: 0.0.40
codegen_flags: <defaults>
</compile_context>

<pallas_src>
import jax
import jax.numpy as jnp
from jax import lax
from jax.experimental import pallas as pl
from jax.experimental.pallas import tpu as pltpu

BN_EPS = 1e-5


def _round_up(x, m):
    return ((x + m - 1) // m) * m


def subnet_kernel(x_ref, scale_ref, shift_ref,
                  w1_ref, b1_ref, w2_ref, b2_ref, w3_ref, b3_ref,
                  o_ref):
    # ---- BatchNorm1d (stats precomputed over the FULL batch, folded into scale/shift) ----
    normed = x_ref[...] * scale_ref[...] + shift_ref[...]          # f32, (TB, IN_P)

    # ---- Dropout: identity (eval mode) ----
    # TODO(synk): stochastic dropout (p > 0 training mode) omitted.

    # ---- linear_1 + relu (bf16 MXU inputs, f32 accumulate) ----
    y1 = jnp.dot(normed.astype(jnp.bfloat16), w1_ref[...],
                 preferred_element_type=jnp.float32)
    y1 = jnp.maximum(y1 + b1_ref[...], 0.0)

    # ---- linear_2 + relu ----
    y2 = jnp.dot(y1.astype(jnp.bfloat16), w2_ref[...],
                 preferred_element_type=jnp.float32)
    y2 = jnp.maximum(y2 + b2_ref[...], 0.0)

    # ---- linear_3 + relu ----
    y3 = jnp.dot(y2.astype(jnp.bfloat16), w3_ref[...],
                 preferred_element_type=jnp.float32)
    y3 = jnp.maximum(y3 + b3_ref[...], 0.0)

    o_ref[...] = y3.astype(o_ref.dtype)


def _vmem_budget_bytes(tb, in_p, h_p):
    f32, bf16 = 4, 2
    x_buf = tb * in_p * f32
    o_buf = tb * h_p * f32
    weights = (in_p * h_p + 2 * h_p * h_p) * bf16
    vecs = (2 * in_p + 3 * h_p) * f32
    need = 2 * (x_buf + o_buf) + 2 * (weights + vecs)   # double-buffered tiles + resident params
    # generous headroom, but stay well under v7x's 64 MiB physical VMEM per TC
    return int(min(max(6 * need, 32 * 1024 * 1024), 56 * 1024 * 1024))


def subnet_forward(x, params, *, tile_batch=128):
    """x: (batch, in_size) float32.  params: dict (weights stored as (in, out))."""
    batch, in_size = x.shape
    hidden = params["w1"].shape[1]

    # ---- padded, lane-dense geometry ----
    in_p = _round_up(in_size, 128)
    h_p = _round_up(hidden, 128)
    tb = _round_up(min(tile_batch, batch), 8)
    b_pad = _round_up(batch, tb)

    # ---- pass 1: full-batch BatchNorm statistics (training-mode, biased variance) ----
    mean = jnp.mean(x, axis=0, keepdims=True)
    var = jnp.mean(jnp.square(x - mean), axis=0, keepdims=True)
    inv_std = lax.rsqrt(var + BN_EPS)
    scale = params["gamma"] * inv_std                  # (1, in)
    shift = params["beta"] - mean * scale              # (1, in)

    # ---- zero-pad operands to lane-dense shapes ----
    xp = jnp.zeros((b_pad, in_p), jnp.float32).at[:batch, :in_size].set(x)
    scale_p = jnp.zeros((1, in_p), jnp.float32).at[:, :in_size].set(scale)
    shift_p = jnp.zeros((1, in_p), jnp.float32).at[:, :in_size].set(shift)

    def pad_w(w, rows, cols):
        return (jnp.zeros((rows, cols), jnp.bfloat16)
                .at[:w.shape[0], :w.shape[1]].set(w.astype(jnp.bfloat16)))

    def pad_b(b, cols):
        return jnp.zeros((1, cols), jnp.float32).at[:, :b.shape[1]].set(b)

    w1p, b1p = pad_w(params["w1"], in_p, h_p), pad_b(params["b1"], h_p)
    w2p, b2p = pad_w(params["w2"], h_p, h_p), pad_b(params["b2"], h_p)
    w3p, b3p = pad_w(params["w3"], h_p, h_p), pad_b(params["b3"], h_p)

    resident = lambda i: (0, 0)   # same block every grid step -> stays VMEM-resident
    grid = (b_pad // tb,)

    out_p = pl.pallas_call(
        subnet_kernel,
        out_shape=jax.ShapeDtypeStruct((b_pad, h_p), jnp.float32),
        grid=grid,
        in_specs=[
            pl.BlockSpec((tb, in_p), lambda i: (i, 0)),   # x tile (pipelined)
            pl.BlockSpec((1, in_p), resident),            # scale
            pl.BlockSpec((1, in_p), resident),            # shift
            pl.BlockSpec((in_p, h_p), resident),          # w1
            pl.BlockSpec((1, h_p), resident),             # b1
            pl.BlockSpec((h_p, h_p), resident),           # w2
            pl.BlockSpec((1, h_p), resident),             # b2
            pl.BlockSpec((h_p, h_p), resident),           # w3
            pl.BlockSpec((1, h_p), resident),             # b3
        ],
        out_specs=pl.BlockSpec((tb, h_p), lambda i: (i, 0)),
        compiler_params=pltpu.CompilerParams(
            dimension_semantics=("parallel",),
            vmem_limit_bytes=_vmem_budget_bytes(tb, in_p, h_p),
        ),
    )(xp, scale_p, shift_p, w1p, b1p, w2p, b2p, w3p, b3p)

    return out_p[:batch, :hidden]


def init_params(key, in_size, hidden_size):
    """Deterministic parameter init (Xavier-uniform-ish for linears)."""
    k1, k2, k3 = jax.random.split(key, 3)

    def xavier(k, fan_in, fan_out):
        limit = jnp.sqrt(6.0 / (fan_in + fan_out))
        # stored as (in, out): already transposed vs. PyTorch's (out, in)
        return jax.random.uniform(k, (fan_in, fan_out), jnp.float32, -limit, limit)

    return {
        # BatchNorm1d affine params (PyTorch defaults: weight=1, bias=0)
        "gamma": jnp.ones((1, in_size), jnp.float32),
        "beta": jnp.zeros((1, in_size), jnp.float32),
        "w1": xavier(k1, in_size, hidden_size),
        "b1": jnp.zeros((1, hidden_size), jnp.float32),
        "w2": xavier(k2, hidden_size, hidden_size),
        "b2": jnp.zeros((1, hidden_size), jnp.float32),
        "w3": xavier(k3, hidden_size, hidden_size),
        "b3": jnp.zeros((1, hidden_size), jnp.float32),
    }


def subnet_reference(x, params):
    """Pure-JAX f32 reference of the same forward pass (for a sanity check)."""
    mean = jnp.mean(x, axis=0, keepdims=True)
    var = jnp.mean((x - mean) ** 2, axis=0, keepdims=True)
    normed = (x - mean) * lax.rsqrt(var + BN_EPS) * params["gamma"] + params["beta"]
    y1 = jnp.maximum(normed @ params["w1"] + params["b1"], 0.0)
    y2 = jnp.maximum(y1 @ params["w2"] + params["b2"], 0.0)
    y3 = jnp.maximum(y2 @ params["w3"] + params["b3"], 0.0)
    return y3


if __name__ == "__main__":
    batch, in_size, hidden_size = 256, 16, 32   # grid of 2 batch tiles at TB=128
    key = jax.random.PRNGKey(0)
    kx, kp = jax.random.split(key)

    x = jax.random.normal(kx, (batch, in_size), jnp.float32)
    params = init_params(kp, in_size, hidden_size)

    out = subnet_forward(x, params)
    out = jax.block_until_ready(out)

    ref = subnet_reference(x, params)
    assert out.shape == (batch, hidden_size)
    # Loosened tolerance: kernel feeds bf16 inputs to the MXU (f32 accumulation);
    # the reference is pure f32.
    assert jnp.allclose(out, ref, atol=5e-2, rtol=5e-2), "mismatch vs reference"

    print("KERNEL_OK")
</pallas_src>

<mosaic_0001>
module attributes {stable_mosaic.version = 11 : i64} {
  func.func @subnet_kernel(%arg0: i32, %arg1: memref<128x128xf32, #tpu.memory_space<vmem>>, %arg2: memref<1x128xf32, #tpu.memory_space<vmem>>, %arg3: memref<1x128xf32, #tpu.memory_space<vmem>>, %arg4: memref<128x128xbf16, #tpu.memory_space<vmem>>, %arg5: memref<1x128xf32, #tpu.memory_space<vmem>>, %arg6: memref<128x128xbf16, #tpu.memory_space<vmem>>, %arg7: memref<1x128xf32, #tpu.memory_space<vmem>>, %arg8: memref<128x128xbf16, #tpu.memory_space<vmem>>, %arg9: memref<1x128xf32, #tpu.memory_space<vmem>>, %arg10: memref<128x128xf32, #tpu.memory_space<vmem>>) attributes {dimension_semantics = [#tpu.dimension_semantics<parallel>], iteration_bounds = array<i64: 2>, scalar_prefetch = 0 : i64, scratch_operands = 0 : i64, tpu.core_type = #tpu.core_type<tc>, window_params = [{transform_indices = @transform_0, window_bounds = array<i64: 128, 128>}, {pipeline_mode = #tpu.pipeline_mode<synchronous>, transform_indices = @transform_1, window_bounds = array<i64: 1, 128>}, {pipeline_mode = #tpu.pipeline_mode<synchronous>, transform_indices = @transform_2, window_bounds = array<i64: 1, 128>}, {pipeline_mode = #tpu.pipeline_mode<synchronous>, transform_indices = @transform_3, window_bounds = array<i64: 128, 128>}, {pipeline_mode = #tpu.pipeline_mode<synchronous>, transform_indices = @transform_4, window_bounds = array<i64: 1, 128>}, {pipeline_mode = #tpu.pipeline_mode<synchronous>, transform_indices = @transform_5, window_bounds = array<i64: 128, 128>}, {pipeline_mode = #tpu.pipeline_mode<synchronous>, transform_indices = @transform_6, window_bounds = array<i64: 1, 128>}, {pipeline_mode = #tpu.pipeline_mode<synchronous>, transform_indices = @transform_7, window_bounds = array<i64: 128, 128>}, {pipeline_mode = #tpu.pipeline_mode<synchronous>, transform_indices = @transform_8, window_bounds = array<i64: 1, 128>}, {transform_indices = @transform_9, window_bounds = array<i64: 128, 128>}]} {
    %c0 = arith.constant 0 : index
    %c0_0 = arith.constant 0 : index
    %0 = vector.load %arg1[%c0, %c0_0] : memref<128x128xf32, #tpu.memory_space<vmem>>, vector<128x128xf32>
    %c0_1 = arith.constant 0 : index
    %c0_2 = arith.constant 0 : index
    %1 = vector.load %arg2[%c0_1, %c0_2] : memref<1x128xf32, #tpu.memory_space<vmem>>, vector<1x128xf32>
    %2 = vector.broadcast %1 : vector<1x128xf32> to vector<128x128xf32>
    %3 = arith.mulf %0, %2 : vector<128x128xf32>
    %c0_3 = arith.constant 0 : index
    %c0_4 = arith.constant 0 : index
    %4 = vector.load %arg3[%c0_3, %c0_4] : memref<1x128xf32, #tpu.memory_space<vmem>>, vector<1x128xf32>
    %5 = vector.broadcast %4 : vector<1x128xf32> to vector<128x128xf32>
    %6 = arith.addf %3, %5 : vector<128x128xf32>
    %7 = arith.truncf %6 : vector<128x128xf32> to vector<128x128xbf16>
    %c0_5 = arith.constant 0 : index
    %c0_6 = arith.constant 0 : index
    %8 = vector.load %arg4[%c0_5, %c0_6] : memref<128x128xbf16, #tpu.memory_space<vmem>>, vector<128x128xbf16>
    %cst = arith.constant dense<0.000000e+00> : vector<128x128xf32>
    %9 = tpu.matmul %7, %8, %cst {dimension_numbers = #tpu.dot_dimension_numbers<[1], [0], [0], [1], [0, 0, 1, 1], [], []>} : vector<128x128xbf16>, vector<128x128xbf16>, vector<128x128xf32> -> vector<128x128xf32>
    %c0_7 = arith.constant 0 : index
    %c0_8 = arith.constant 0 : index
    %10 = vector.load %arg5[%c0_7, %c0_8] : memref<1x128xf32, #tpu.memory_space<vmem>>, vector<1x128xf32>
    %11 = vector.broadcast %10 : vector<1x128xf32> to vector<128x128xf32>
    %12 = arith.addf %9, %11 : vector<128x128xf32>
    %cst_9 = arith.constant 0.000000e+00 : f32
    %13 = vector.broadcast %cst_9 : f32 to vector<128x128xf32>
    %14 = arith.maximumf %12, %13 : vector<128x128xf32>
    %15 = arith.truncf %14 : vector<128x128xf32> to vector<128x128xbf16>
    %c0_10 = arith.constant 0 : index
    %c0_11 = arith.constant 0 : index
    %16 = vector.load %arg6[%c0_10, %c0_11] : memref<128x128xbf16, #tpu.memory_space<vmem>>, vector<128x128xbf16>
    %cst_12 = arith.constant dense<0.000000e+00> : vector<128x128xf32>
    %17 = tpu.matmul %15, %16, %cst_12 {dimension_numbers = #tpu.dot_dimension_numbers<[1], [0], [0], [1], [0, 0, 1, 1], [], []>} : vector<128x128xbf16>, vector<128x128xbf16>, vector<128x128xf32> -> vector<128x128xf32>
    %c0_13 = arith.constant 0 : index
    %c0_14 = arith.constant 0 : index
    %18 = vector.load %arg7[%c0_13, %c0_14] : memref<1x128xf32, #tpu.memory_space<vmem>>, vector<1x128xf32>
    %19 = vector.broadcast %18 : vector<1x128xf32> to vector<128x128xf32>
    %20 = arith.addf %17, %19 : vector<128x128xf32>
    %cst_15 = arith.constant 0.000000e+00 : f32
    %21 = vector.broadcast %cst_15 : f32 to vector<128x128xf32>
    %22 = arith.maximumf %20, %21 : vector<128x128xf32>
    %23 = arith.truncf %22 : vector<128x128xf32> to vector<128x128xbf16>
    %c0_16 = arith.constant 0 : index
    %c0_17 = arith.constant 0 : index
    %24 = vector.load %arg8[%c0_16, %c0_17] : memref<128x128xbf16, #tpu.memory_space<vmem>>, vector<128x128xbf16>
    %cst_18 = arith.constant dense<0.000000e+00> : vector<128x128xf32>
    %25 = tpu.matmul %23, %24, %cst_18 {dimension_numbers = #tpu.dot_dimension_numbers<[1], [0], [0], [1], [0, 0, 1, 1], [], []>} : vector<128x128xbf16>, vector<128x128xbf16>, vector<128x128xf32> -> vector<128x128xf32>
    %c0_19 = arith.constant 0 : index
    %c0_20 = arith.constant 0 : index
    %26 = vector.load %arg9[%c0_19, %c0_20] : memref<1x128xf32, #tpu.memory_space<vmem>>, vector<1x128xf32>
    %27 = vector.broadcast %26 : vector<1x128xf32> to vector<128x128xf32>
    %28 = arith.addf %25, %27 : vector<128x128xf32>
    %cst_21 = arith.constant 0.000000e+00 : f32
    %29 = vector.broadcast %cst_21 : f32 to vector<128x128xf32>
    %30 = arith.maximumf %28, %29 : vector<128x128xf32>
    %c0_22 = arith.constant 0 : index
    %c0_23 = arith.constant 0 : index
    %31 = vector.load %arg10[%c0_22, %c0_23] : memref<128x128xf32, #tpu.memory_space<vmem>>, vector<128x128xf32>
    tpu.vector_store %arg10[%c0_22, %c0_23], %30 {strides = array<i32>} : memref<128x128xf32, #tpu.memory_space<vmem>>, vector<128x128xf32>,
    return
  }
  func.func @transform_0(%arg0: i32) -> (i32, i32) {
    %c0_i32 = arith.constant 0 : i32
    %c0_i32_0 = arith.constant 0 : i32
    return %arg0, %c0_i32 : i32, i32
  }
  func.func @transform_1(%arg0: i32) -> (i32, i32) {
    %c0_i32 = arith.constant 0 : i32
    %c0_i32_0 = arith.constant 0 : i32
    %c0_i32_1 = arith.constant 0 : i32
    return %c0_i32, %c0_i32_0 : i32, i32
  }
  func.func @transform_2(%arg0: i32) -> (i32, i32) {
    %c0_i32 = arith.constant 0 : i32
    %c0_i32_0 = arith.constant 0 : i32
    %c0_i32_1 = arith.constant 0 : i32
    return %c0_i32, %c0_i32_0 : i32, i32
  }
  func.func @transform_3(%arg0: i32) -> (i32, i32) {
    %c0_i32 = arith.constant 0 : i32
    %c0_i32_0 = arith.constant 0 : i32
    %c0_i32_1 = arith.constant 0 : i32
    return %c0_i32, %c0_i32_0 : i32, i32
  }
  func.func @transform_4(%arg0: i32) -> (i32, i32) {
    %c0_i32 = arith.constant 0 : i32
    %c0_i32_0 = arith.constant 0 : i32
    %c0_i32_1 = arith.constant 0 : i32
    return %c0_i32, %c0_i32_0 : i32, i32
  }
  func.func @transform_5(%arg0: i32) -> (i32, i32) {
    %c0_i32 = arith.constant 0 : i32
    %c0_i32_0 = arith.constant 0 : i32
    %c0_i32_1 = arith.constant 0 : i32
    return %c0_i32, %c0_i32_0 : i32, i32
  }
  func.func @transform_6(%arg0: i32) -> (i32, i32) {
    %c0_i32 = arith.constant 0 : i32
    %c0_i32_0 = arith.constant 0 : i32
    %c0_i32_1 = arith.constant 0 : i32
    return %c0_i32, %c0_i32_0 : i32, i32
  }
  func.func @transform_7(%arg0: i32) -> (i32, i32) {
    %c0_i32 = arith.constant 0 : i32
    %c0_i32_0 = arith.constant 0 : i32
    %c0_i32_1 = arith.constant 0 : i32
    return %c0_i32, %c0_i32_0 : i32, i32
  }
  func.func @transform_8(%arg0: i32) -> (i32, i32) {
    %c0_i32 = arith.constant 0 : i32
    %c0_i32_0 = arith.constant 0 : i32
    %c0_i32_1 = arith.constant 0 : i32
    return %c0_i32, %c0_i32_0 : i32, i32
  }
  func.func @transform_9(%arg0: i32) -> (i32, i32) {
    %c0_i32 = arith.constant 0 : i32
    %c0_i32_0 = arith.constant 0 : i32
    return %arg0, %c0_i32 : i32, i32
  }
}

</mosaic_0001>

<llo_original>
// kernel: tpu_custom_call.1
$region0: #{tpu_custom_call.1}
  #allocation0 [shape = 'u32[]', space=smem, size = 0x4, offset = 0x4, fixed_abs, tag = 'smem constant byte address 0x4 - core index']
  #allocation1 [shape = 'u32[144,128]{1,0:T(1,128)}', space=vmem, size = 0x12000, scoped, tag = 'internal scratch']
  %s0 = inlined_call_operand.hbm [shape: f32[256,128], index: 0, kind: input, shape index: {}]
  %s1 = inlined_call_operand.vmem [shape: f32[1,128], index: 1, kind: input, shape index: {}]
  %s2 = inlined_call_operand.vmem [shape: f32[1,128], index: 2, kind: input, shape index: {}]
  %s3 = inlined_call_operand.hbm [shape: bf16[128,128], index: 3, kind: input, shape index: {}]
  %s4 = inlined_call_operand.vmem [shape: f32[1,128], index: 4, kind: input, shape index: {}]
  %s5 = inlined_call_operand.hbm [shape: bf16[128,128], index: 5, kind: input, shape index: {}]
  %s6 = inlined_call_operand.vmem [shape: f32[1,128], index: 6, kind: input, shape index: {}]
  %s7 = inlined_call_operand.hbm [shape: bf16[128,128], index: 7, kind: input, shape index: {}]
  %s8 = inlined_call_operand.vmem [shape: f32[1,128], index: 8, kind: input, shape index: {}]
  %s9 = inlined_call_operand.hbm [shape: f32[256,128], index: 9, kind: output, shape index: {}]
  %s10 = sld [smem:[#allocation0]]
  $region85: #{tpu_custom_call.1} parent=0
    _
  %s12 = ssub.s32 1, %s10
  %s13 = scalar_select 0, %s12, %s10
  $region1: #{tpu_custom_call.1} parent=0
    #allocation2 [shape = 'u8[131072]{0}', space=vmem, size = 0x20000, scoped, tag = 'input window, operand 0']
    #allocation3 [shape = 's32[2]{0}', space=sflag, size = 0x8, scoped, tag = 'scoped memory for tpu_custom_call.1']
    #allocation4 [shape = 's32[2]{0}', space=sflag, size = 0x8, scoped, tag = 'scoped memory for tpu_custom_call.1']
    #allocation5 [shape = 'u8[32768]{0}', space=vmem, size = 0x8000, scoped, tag = 'input window, operand 3, single buffered']
    #allocation6 [shape = 's32[1]{0}', space=sflag, size = 0x4, scoped, tag = 'scoped memory for tpu_custom_call.1']
    #allocation7 [shape = 'u8[32768]{0}', space=vmem, size = 0x8000, scoped, tag = 'input window, operand 5, single buffered']
    #allocation8 [shape = 'u8[32768]{0}', space=vmem, size = 0x8000, scoped, tag = 'input window, operand 7, single buffered']
    #allocation9 [shape = 's32[1]{0}', space=sflag, size = 0x4, scoped, tag = 'scoped memory for tpu_custom_call.1']
    #allocation10 [shape = 'u8[131072]{0}', space=vmem, size = 0x20000, scoped, tag = 'output window, operand 0']
    %14 = vsyncpa [#allocation3], 0
    %s15 = scalar_lea.sflag [#allocation3], 1
    %16 = vsyncpa %s15, 0
    %17 = vsyncpa [#allocation6], 0
    %18 = vsyncpa [#allocation9], 0
    %19 = vsyncpa [#allocation4], 0
    %s20 = scalar_lea.sflag [#allocation4], 1
    %21 = vsyncpa %s20, 0
    loop: start=0, step=1, limit=4
    $region2: #{tpu_custom_call.1} parent=1 // loop_pre_header
      _
    $region3: #{tpu_custom_call.1} parent=1 // loop_header
      %s23 = sphi 0, %s27
      %p24 = scmp.ge.s32.totalorder %s23, 4
      %s33 = sphi 0, %s35
      %s36 = sphi 0, %s33
      %s37 = sphi 0, %s36
      %s53 = sphi 0, %s37
      %s57 = sphi 0, %s57
      %s59 = sphi 0, %s57
      %s60 = sphi 0, %s59
      %s74 = sphi 0, %s60
      %s78 = sphi 0, %s78
      %s80 = sphi 0, %s78
      %s81 = sphi 0, %s80
      %s95 = sphi 0, %s81
      %s99 = sphi 0, %s99
      %s101 = sphi 0, %s99
      %s102 = sphi 0, %s101
      %s116 = sphi 0, %s102
      %s120 = sphi 0, %s120
      %s122 = sphi 0, %s120
      %s123 = sphi 0, %s122
      %s137 = sphi 0, %s123
      %s141 = sphi 0, %s141
      %s143 = sphi 0, %s141
      %s144 = sphi 0, %s143
      %s158 = sphi 0, %s144
      %s162 = sphi 0, %s162
      %s164 = sphi 0, %s162
      %s165 = sphi 0, %s164
      %s179 = sphi 0, %s165
      %s183 = sphi 0, %s183
      %s185 = sphi 0, %s183
      %s186 = sphi 0, %s185
      %s200 = sphi 0, %s186
      %s204 = sphi 0, %s204
      %s206 = sphi 0, %s204
      %s207 = sphi 0, %s206
      %s221 = sphi 0, %s207
      %s227 = sphi 0, %s229
      %s230 = sphi 0, %s227
      %s231 = sphi 0, %s230
      %s247 = sphi 0, %s231
    $region4: #{tpu_custom_call.1} parent=1 // loop_header_branch
      %26 = sbr.rel (%p24) target = $region8
    $region5: #{tpu_custom_call.1} parent=1 // loop_body
      %s28 = ssub.s32 %s23, 1
      %s29 = ssub.s32 %s23, 2
      %s30 = sadd.s32 %s23, 1
      %s31 = ssub.s32 %s23, %s30
      %p32 = scmp.eq.s32.totalorder %s31, 0
      %s34 = sadd.s32 %s33, 1
      %s35 = scalar_select %p32, %s33, %s34
      %p38 = pneg %p32
      %p39 = scmp.eq.s32.totalorder %s23, 1
      %p40 = por %p38, %p39
      %p41 = scmp.ne.s32.totalorder %s33, %s36
      %p42 = scmp.eq.s32.totalorder %s23, 0
      %p43 = por %p41, %p42
      %p44 = scmp.ne.s32.totalorder %s33, %s36
      %p45 = scmp.eq.s32.totalorder %s28, 1
      %p46 = por %p44, %p45
      %p47 = scmp.ne.s32.totalorder %s36, %s37
      %p48 = scmp.eq.s32.totalorder %s28, 0
      %p49 = por %p47, %p48
      %p50 = scmp.ne.s32.totalorder %s36, %s37
      %p51 = scmp.eq.s32.totalorder %s29, 1
      %p52 = por %p50, %p51
      %p54 = scmp.ne.s32.totalorder %s37, %s53
      %p55 = scmp.eq.s32.totalorder %s29, 0
      %p56 = por %p54, %p55
      %s58 = sadd.s32 %s57, 1
      %p61 = scmp.eq.s32.totalorder %s23, 1
      %p62 = scmp.ne.s32.totalorder %s57, %s59
      %p63 = scmp.eq.s32.totalorder %s23, 0
      %p64 = por %p62, %p63
      %p65 = scmp.ne.s32.totalorder %s57, %s59
      %p66 = scmp.eq.s32.totalorder %s28, 1
      %p67 = por %p65, %p66
      %p68 = scmp.ne.s32.totalorder %s59, %s60
      %p69 = scmp.eq.s32.totalorder %s28, 0
      %p70 = por %p68, %p69
      %p71 = scmp.ne.s32.totalorder %s59, %s60
      %p72 = scmp.eq.s32.totalorder %s29, 1
      %p73 = por %p71, %p72
      %p75 = scmp.ne.s32.totalorder %s60, %s74
      %p76 = scmp.eq.s32.totalorder %s29, 0
      %p77 = por %p75, %p76
      %s79 = sadd.s32 %s78, 1
      %p82 = scmp.eq.s32.totalorder %s23, 1
      %p83 = scmp.ne.s32.totalorder %s78, %s80
      %p84 = scmp.eq.s32.totalorder %s23, 0
      %p85 = por %p83, %p84
      %p86 = scmp.ne.s32.totalorder %s78, %s80
      %p87 = scmp.eq.s32.totalorder %s28, 1
      %p88 = por %p86, %p87
      %p89 = scmp.ne.s32.totalorder %s80, %s81
      %p90 = scmp.eq.s32.totalorder %s28, 0
      %p91 = por %p89, %p90
      %p92 = scmp.ne.s32.totalorder %s80, %s81
      %p93 = scmp.eq.s32.totalorder %s29, 1
      %p94 = por %p92, %p93
      %p96 = scmp.ne.s32.totalorder %s81, %s95
      %p97 = scmp.eq.s32.totalorder %s29, 0
      %p98 = por %p96, %p97
      %s100 = sadd.s32 %s99, 1
      %p103 = scmp.eq.s32.totalorder %s23, 1
      %p104 = scmp.ne.s32.totalorder %s99, %s101
      %p105 = scmp.eq.s32.totalorder %s23, 0
      %p106 = por %p104, %p105
      %p107 = scmp.ne.s32.totalorder %s99, %s101
      %p108 = scmp.eq.s32.totalorder %s28, 1
      %p109 = por %p107, %p108
      %p110 = scmp.ne.s32.totalorder %s101, %s102
      %p111 = scmp.eq.s32.totalorder %s28, 0
      %p112 = por %p110, %p111
      %p113 = scmp.ne.s32.totalorder %s101, %s102
      %p114 = scmp.eq.s32.totalorder %s29, 1
      %p115 = por %p113, %p114
      %p117 = scmp.ne.s32.totalorder %s102, %s116
      %p118 = scmp.eq.s32.totalorder %s29, 0
      %p119 = por %p117, %p118
      %s121 = sadd.s32 %s120, 1
      %p124 = scmp.eq.s32.totalorder %s23, 1
      %p125 = scmp.ne.s32.totalorder %s120, %s122
      %p126 = scmp.eq.s32.totalorder %s23, 0
      %p127 = por %p125, %p126
      %p128 = scmp.ne.s32.totalorder %s120, %s122
      %p129 = scmp.eq.s32.totalorder %s28, 1
      %p130 = por %p128, %p129
      %p131 = scmp.ne.s32.totalorder %s122, %s123
      %p132 = scmp.eq.s32.totalorder %s28, 0
      %p133 = por %p131, %p132
      %p134 = scmp.ne.s32.totalorder %s122, %s123
      %p135 = scmp.eq.s32.totalorder %s29, 1
      %p136 = por %p134, %p135
      %p138 = scmp.ne.s32.totalorder %s123, %s137
      %p139 = scmp.eq.s32.totalorder %s29, 0
      %p140 = por %p138, %p139
      %s142 = sadd.s32 %s141, 1
      %p145 = scmp.eq.s32.totalorder %s23, 1
      %p146 = scmp.ne.s32.totalorder %s141, %s143
      %p147 = scmp.eq.s32.totalorder %s23, 0
      %p148 = por %p146, %p147
      %p149 = scmp.ne.s32.totalorder %s141, %s143
      %p150 = scmp.eq.s32.totalorder %s28, 1
      %p151 = por %p149, %p150
      %p152 = scmp.ne.s32.totalorder %s143, %s144
      %p153 = scmp.eq.s32.totalorder %s28, 0
      %p154 = por %p152, %p153
      %p155 = scmp.ne.s32.totalorder %s143, %s144
      %p156 = scmp.eq.s32.totalorder %s29, 1
      %p157 = por %p155, %p156
      %p159 = scmp.ne.s32.totalorder %s144, %s158
      %p160 = scmp.eq.s32.totalorder %s29, 0
      %p161 = por %p159, %p160
      %s163 = sadd.s32 %s162, 1
      %p166 = scmp.eq.s32.totalorder %s23, 1
      %p167 = scmp.ne.s32.totalorder %s162, %s164
      %p168 = scmp.eq.s32.totalorder %s23, 0
      %p169 = por %p167, %p168
      %p170 = scmp.ne.s32.totalorder %s162, %s164
      %p171 = scmp.eq.s32.totalorder %s28, 1
      %p172 = por %p170, %p171
      %p173 = scmp.ne.s32.totalorder %s164, %s165
      %p174 = scmp.eq.s32.totalorder %s28, 0
      %p175 = por %p173, %p174
      %p176 = scmp.ne.s32.totalorder %s164, %s165
      %p177 = scmp.eq.s32.totalorder %s29, 1
      %p178 = por %p176, %p177
      %p180 = scmp.ne.s32.totalorder %s165, %s179
      %p181 = scmp.eq.s32.totalorder %s29, 0
      %p182 = por %p180, %p181
      %s184 = sadd.s32 %s183, 1
      %p187 = scmp.eq.s32.totalorder %s23, 1
      %p188 = scmp.ne.s32.totalorder %s183, %s185
      %p189 = scmp.eq.s32.totalorder %s23, 0
      %p190 = por %p188, %p189
      %p191 = scmp.ne.s32.totalorder %s183, %s185
      %p192 = scmp.eq.s32.totalorder %s28, 1
      %p193 = por %p191, %p192
      %p194 = scmp.ne.s32.totalorder %s185, %s186
      %p195 = scmp.eq.s32.totalorder %s28, 0
      %p196 = por %p194, %p195
      %p197 = scmp.ne.s32.totalorder %s185, %s186
      %p198 = scmp.eq.s32.totalorder %s29, 1
      %p199 = por %p197, %p198
      %p201 = scmp.ne.s32.totalorder %s186, %s200
      %p202 = scmp.eq.s32.totalorder %s29, 0
      %p203 = por %p201, %p202
      %s205 = sadd.s32 %s204, 1
      %p208 = scmp.eq.s32.totalorder %s23, 1
      %p209 = scmp.ne.s32.totalorder %s204, %s206
      %p210 = scmp.eq.s32.totalorder %s23, 0
      %p211 = por %p209, %p210
      %p212 = scmp.ne.s32.totalorder %s204, %s206
      %p213 = scmp.eq.s32.totalorder %s28, 1
      %p214 = por %p212, %p213
      %p215 = scmp.ne.s32.totalorder %s206, %s207
      %p216 = scmp.eq.s32.totalorder %s28, 0
      %p217 = por %p215, %p216
      %p218 = scmp.ne.s32.totalorder %s206, %s207
      %p219 = scmp.eq.s32.totalorder %s29, 1
      %p220 = por %p218, %p219
      %p222 = scmp.ne.s32.totalorder %s207, %s221
      %p223 = scmp.eq.s32.totalorder %s29, 0
      %p224 = por %p222, %p223
      %s225 = ssub.s32 %s23, %s30
      %p226 = scmp.eq.s32.totalorder %s225, 0
      %s228 = sadd.s32 %s227, 1
      %s229 = scalar_select %p226, %s227, %s228
      %p232 = pneg %p226
      %p233 = scmp.eq.s32.totalorder %s23, 1
      %p234 = por %p232, %p233
      %p235 = scmp.ne.s32.totalorder %s227, %s230
      %p236 = scmp.eq.s32.totalorder %s23, 0
      %p237 = por %p235, %p236
      %p238 = scmp.ne.s32.totalorder %s227, %s230
      %p239 = scmp.eq.s32.totalorder %s28, 1
      %p240 = por %p238, %p239
      %p241 = scmp.ne.s32.totalorder %s230, %s231
      %p242 = scmp.eq.s32.totalorder %s28, 0
      %p243 = por %p241, %p242
      %p244 = scmp.ne.s32.totalorder %s230, %s231
      %p245 = scmp.eq.s32.totalorder %s29, 1
      %p246 = por %p244, %p245
      %p248 = scmp.ne.s32.totalorder %s231, %s247
      %p249 = scmp.eq.s32.totalorder %s29, 0
      %p250 = por %p248, %p249
      %p251 = scmp.le.s32.totalorder 1, %s23
      %p252 = scmp.lt.s32.totalorder %s23, 3
      %p253 = pnand %p251, %p252
      %p254 = pneg %p253
      // Predicated region
      $region9: #{tpu_custom_call.1} parent=5 // pred_check
        _
      $region10: #{tpu_custom_call.1} parent=5 // pred_check_branch
        %256 = sbr.rel (%p253) target = $region12
      $region11: #{tpu_custom_call.1} parent=5 // pred_region
        %s257 = ssub.s32 %s23, 1
        // Predicated region
        $region13: #{tpu_custom_call.1} parent=11 // pred_check
          %p258 = pneg %p70
        $region14: #{tpu_custom_call.1} parent=11 // pred_check_branch
          %260 = sbr.rel (%p258) target = $region16
        $region15: #{tpu_custom_call.1} parent=11 // pred_region
          _
        $region16: #{tpu_custom_call.1} parent=11 // pred_fallthru
          _
        // Predicated region
        $region17: #{tpu_custom_call.1} parent=11 // pred_check
          %p261 = pneg %p91
        $region18: #{tpu_custom_call.1} parent=11 // pred_check_branch
          %263 = sbr.rel (%p261) target = $region20
        $region19: #{tpu_custom_call.1} parent=11 // pred_region
          _
        $region20: #{tpu_custom_call.1} parent=11 // pred_fallthru
          _
        // Predicated region
        $region21: #{tpu_custom_call.1} parent=11 // pred_check
          %p264 = pneg %p112
        $region22: #{tpu_custom_call.1} parent=11 // pred_check_branch
          %266 = sbr.rel (%p264) target = $region24
        $region23: #{tpu_custom_call.1} parent=11 // pred_region
          %s268 = ssub.s32 1024, 1024
          %269 = vsyncadd [#allocation6], %s268
          %s270 = sshll.u32 [#allocation5], 4
          %s271 = int_to_ptr.vmem [resolvable:$true] %s270
          %276 = dma.hbm_to_vmem [thread:$0]  %s3, 1024, %s271, [#allocation6], 64, 64, 4
        $region24: #{tpu_custom_call.1} parent=11 // pred_fallthru
          _
        // Predicated region
        $region25: #{tpu_custom_call.1} parent=11 // pred_check
          %p277 = pneg %p133
        $region26: #{tpu_custom_call.1} parent=11 // pred_check_branch
          %279 = sbr.rel (%p277) target = $region28
        $region27: #{tpu_custom_call.1} parent=11 // pred_region
          _
        $region28: #{tpu_custom_call.1} parent=11 // pred_fallthru
          _
        // Predicated region
        $region29: #{tpu_custom_call.1} parent=11 // pred_check
          %p280 = pneg %p154
        $region30: #{tpu_custom_call.1} parent=11 // pred_check_branch
          %282 = sbr.rel (%p280) target = $region32
        $region31: #{tpu_custom_call.1} parent=11 // pred_region
          %s284 = ssub.s32 1024, 1024
          %285 = vsyncadd [#allocation6], %s284
          %s286 = sshll.u32 [#allocation7], 4
          %s287 = int_to_ptr.vmem [resolvable:$true] %s286
          %292 = dma.hbm_to_vmem [thread:$0]  %s5, 1024, %s287, [#allocation6], 64, 64, 4
        $region32: #{tpu_custom_call.1} parent=11 // pred_fallthru
          _
        // Predicated region
        $region33: #{tpu_custom_call.1} parent=11 // pred_check
          %p293 = pneg %p175
        $region34: #{tpu_custom_call.1} parent=11 // pred_check_branch
          %295 = sbr.rel (%p293) target = $region36
        $region35: #{tpu_custom_call.1} parent=11 // pred_region
          _
        $region36: #{tpu_custom_call.1} parent=11 // pred_fallthru
          _
        // Predicated region
        $region37: #{tpu_custom_call.1} parent=11 // pred_check
          %p296 = pneg %p196
        $region38: #{tpu_custom_call.1} parent=11 // pred_check_branch
          %298 = sbr.rel (%p296) target = $region40
        $region39: #{tpu_custom_call.1} parent=11 // pred_region
          %s300 = ssub.s32 1024, 1024
          %301 = vsyncadd [#allocation9], %s300
          %s302 = sshll.u32 [#allocation8], 4
          %s303 = int_to_ptr.vmem [resolvable:$true] %s302
          %308 = dma.hbm_to_vmem [thread:$0]  %s7, 1024, %s303, [#allocation9], 64, 64, 4
        $region40: #{tpu_custom_call.1} parent=11 // pred_fallthru
          _
        // Predicated region
        $region41: #{tpu_custom_call.1} parent=11 // pred_check
          %p309 = pneg %p217
        $region42: #{tpu_custom_call.1} parent=11 // pred_check_branch
          %311 = sbr.rel (%p309) target = $region44
        $region43: #{tpu_custom_call.1} parent=11 // pred_region
          _
        $region44: #{tpu_custom_call.1} parent=11 // pred_fallthru
          _
      $region12: #{tpu_custom_call.1} parent=5 // pred_fallthru
        _
      %p312 = scmp.lt.s32.totalorder %s23, 2
      // Predicated region
      $region45: #{tpu_custom_call.1} parent=5 // pred_check
        %p313 = pneg %p312
      $region46: #{tpu_custom_call.1} parent=5 // pred_check_branch
        %315 = sbr.rel (%p313) target = $region48
      $region47: #{tpu_custom_call.1} parent=5 // pred_region
        // Predicated region
        $region49: #{tpu_custom_call.1} parent=47 // pred_check
          %p316 = pneg %p43
        $region50: #{tpu_custom_call.1} parent=47 // pred_check_branch
          %318 = sbr.rel (%p316) target = $region52
        $region51: #{tpu_custom_call.1} parent=47 // pred_region
          %s319 = sand.u32 %s33, 1
          %s320 = scalar_lea.sflag [#allocation3], %s319
          %s321 = sand.u32 %s33, 1
          %s322 = smul.addr %s321, 128
          %s323 = scalar_lea.vmem [#allocation2], %s322
          %s324 = smul.u32 16, %s23
          %s326 = ssub.s32 2048, 2048
          %327 = vsyncadd %s320, %s326
          %s328 = smul.addr %s324, 128
          %s329 = scalar_lea.hbm %s0, %s328
          %s330 = sshll.u32 %s323, 4
          %s331 = int_to_ptr.vmem [resolvable:$true] %s330
          %336 = dma.hbm_to_vmem [thread:$0]  %s329, 2048, %s331, %s320, 128, 128, 8
        $region52: #{tpu_custom_call.1} parent=47 // pred_fallthru
          _
      $region48: #{tpu_custom_call.1} parent=5 // pred_fallthru
        _
      %p337 = scmp.le.s32.totalorder 1, %s23
      %p338 = scmp.lt.s32.totalorder %s23, 3
      %p339 = pnand %p337, %p338
      %p340 = pneg %p339
      // Predicated region
      $region53: #{tpu_custom_call.1} parent=5 // pred_check
        _
      $region54: #{tpu_custom_call.1} parent=5 // pred_check_branch
        %342 = sbr.rel (%p339) target = $region56
      $region55: #{tpu_custom_call.1} parent=5 // pred_region
        %s343 = ssub.s32 %s23, 1
        %s344 = sand.u32 %s36, 1
        %s345 = scalar_lea.sflag [#allocation3], %s344
        %s346 = sand.u32 %s36, 1
        %s347 = smul.addr %s346, 128
        %s348 = scalar_lea.vmem [#allocation2], %s347
        // Predicated region
        $region57: #{tpu_custom_call.1} parent=55 // pred_check
          %p349 = pneg %p49
        $region58: #{tpu_custom_call.1} parent=55 // pred_check_branch
          %351 = sbr.rel (%p349) target = $region60
        $region59: #{tpu_custom_call.1} parent=55 // pred_region
          %352 = dma.done %s345, 2048
        $region60: #{tpu_custom_call.1} parent=55 // pred_fallthru
          _
        // Predicated region
        $region61: #{tpu_custom_call.1} parent=55 // pred_check
          %p353 = pneg %p112
        $region62: #{tpu_custom_call.1} parent=55 // pred_check_branch
          %355 = sbr.rel (%p353) target = $region64
        $region63: #{tpu_custom_call.1} parent=55 // pred_region
          %356 = dma.done [#allocation6], 1024
        $region64: #{tpu_custom_call.1} parent=55 // pred_fallthru
          _
        // Predicated region
        $region65: #{tpu_custom_call.1} parent=55 // pred_check
          %p357 = pneg %p154
        $region66: #{tpu_custom_call.1} parent=55 // pred_check_branch
          %359 = sbr.rel (%p357) target = $region68
        $region67: #{tpu_custom_call.1} parent=55 // pred_region
          %360 = dma.done [#allocation6], 1024
        $region68: #{tpu_custom_call.1} parent=55 // pred_fallthru
          _
        // Predicated region
        $region69: #{tpu_custom_call.1} parent=55 // pred_check
          %p361 = pneg %p196
        $region70: #{tpu_custom_call.1} parent=55 // pred_check_branch
          %363 = sbr.rel (%p361) target = $region72
        $region71: #{tpu_custom_call.1} parent=55 // pred_region
          %364 = dma.done [#allocation9], 1024
        $region72: #{tpu_custom_call.1} parent=55 // pred_fallthru
          _
        %s365 = sand.u32 %s36, 1
        %s366 = scalar_lea.sflag [#allocation3], %s365
        %s367 = sand.u32 %s36, 1
        %s368 = smul.addr %s367, 128
        %s369 = scalar_lea.vmem [#allocation2], %s368
        %p370 = pneg %p49
        %p371 = pneg %p46
        %p372 = pneg %p70
        %p373 = pneg %p67
        %p374 = pneg %p91
        %p375 = pneg %p88
        %p376 = pneg %p112
        %p377 = pneg %p109
        %p378 = pneg %p133
        %p379 = pneg %p130
        %p380 = pneg %p154
        %p381 = pneg %p151
        %p382 = pneg %p175
        %p383 = pneg %p172
        %p384 = pneg %p196
        %p385 = pneg %p193
        %p386 = pneg %p217
        %p387 = pneg %p214
        %p388 = pneg %p243
        %p389 = pneg %p240
        %s390 = sand.u32 %s230, 1
        %s391 = scalar_lea.sflag [#allocation4], %s390
        %s392 = sand.u32 %s230, 1
        %s393 = smul.addr %s392, 128
        %s394 = scalar_lea.vmem [#allocation10], %s393
        %s395 = smul.u32 16, %s28
        %s396 = smul.u32 16, %s28
        %v398 = vld [vmem:[%s348] sm:$0xff]
        %v399 = vld [vmem:[%s348 + $0x8] sm:$0xff]
        %v400 = vld [vmem:[%s348 + $0x10] sm:$0xff]
        %v401 = vld [vmem:[%s348 + $0x18] sm:$0xff]
        %v402 = vld [vmem:[%s348 + $0x20] sm:$0xff]
        %v403 = vld [vmem:[%s348 + $0x28] sm:$0xff]
        %v404 = vld [vmem:[%s348 + $0x30] sm:$0xff]
        %v405 = vld [vmem:[%s348 + $0x38] sm:$0xff]
        %v406 = vld [vmem:[%s348 + $0x40] sm:$0xff]
        %v407 = vld [vmem:[%s348 + $0x48] sm:$0xff]
        %v408 = vld [vmem:[%s348 + $0x50] sm:$0xff]
        %v409 = vld [vmem:[%s348 + $0x58] sm:$0xff]
        %v410 = vld [vmem:[%s348 + $0x60] sm:$0xff]
        %v411 = vld [vmem:[%s348 + $0x68] sm:$0xff]
        %v412 = vld [vmem:[%s348 + $0x70] sm:$0xff]
        %v413 = vld [vmem:[%s348 + $0x78] sm:$0xff]
        %v414 = vld [vmem:[%s1] sm:$0x1]
        %v416 = vlaneseq
        %v417 = vshrl.u32 %v416, 7
        %v418 = vsub.s32 0, %v417
        %v419 = vrot.slane %v414, %v418
        %v421 = vmul.f32 %v398, %v419
        %v422 = vmul.f32 %v399, %v419
        %v423 = vmul.f32 %v400, %v419
        %v424 = vmul.f32 %v401, %v419
        %v425 = vmul.f32 %v402, %v419
        %v426 = vmul.f32 %v403, %v419
        %v427 = vmul.f32 %v404, %v419
        %v428 = vmul.f32 %v405, %v419
        %v429 = vmul.f32 %v406, %v419
        %v430 = vmul.f32 %v407, %v419
        %v431 = vmul.f32 %v408, %v419
        %v432 = vmul.f32 %v409, %v419
        %v433 = vmul.f32 %v410, %v419
        %v434 = vmul.f32 %v411, %v419
        %v435 = vmul.f32 %v412, %v419
        %v436 = vmul.f32 %v413, %v419
        %v437 = vld [vmem:[%s2] sm:$0x1]
        %v439 = vlaneseq
        %v440 = vshrl.u32 %v439, 7
        %v441 = vsub.s32 0, %v440
        %v442 = vrot.slane %v437, %v441
        %v444 = vadd.f32 %v421, %v442
        %v445 = vadd.f32 %v422, %v442
        %v446 = vadd.f32 %v423, %v442
        %v447 = vadd.f32 %v424, %v442
        %v448 = vadd.f32 %v425, %v442
        %v449 = vadd.f32 %v426, %v442
        %v450 = vadd.f32 %v427, %v442
        %v451 = vadd.f32 %v428, %v442
        %v452 = vadd.f32 %v429, %v442
        %v453 = vadd.f32 %v430, %v442
        %v454 = vadd.f32 %v431, %v442
        %v455 = vadd.f32 %v432, %v442
        %v456 = vadd.f32 %v433, %v442
        %v457 = vadd.f32 %v434, %v442
        %v458 = vadd.f32 %v435, %v442
        %v459 = vadd.f32 %v436, %v442
        %v460 = vpack.c.bf16 %v445, %v444
        %v461 = vpack.c.bf16 %v447, %v446
        %v462 = vpack.c.bf16 %v449, %v448
        %v463 = vpack.c.bf16 %v451, %v450
        %v464 = vpack.c.bf16 %v453, %v452
        %v465 = vpack.c.bf16 %v455, %v454
        %v466 = vpack.c.bf16 %v457, %v456
        %v467 = vpack.c.bf16 %v459, %v458
        %v468 = vld [vmem:[#allocation5] sm:$0xf]
        %v469 = vld [vmem:[#allocation5 + $0x4] sm:$0xf]
        %v470 = vld [vmem:[#allocation5 + $0x8] sm:$0xf]
        %v471 = vld [vmem:[#allocation5 + $0xc] sm:$0xf]
        %v472 = vld [vmem:[#allocation5 + $0x10] sm:$0xf]
        %v473 = vld [vmem:[#allocation5 + $0x14] sm:$0xf]
        %v474 = vld [vmem:[#allocation5 + $0x18] sm:$0xf]
        %v475 = vld [vmem:[#allocation5 + $0x1c] sm:$0xf]
        %v476 = vld [vmem:[#allocation5 + $0x20] sm:$0xf]
        %v477 = vld [vmem:[#allocation5 + $0x24] sm:$0xf]
        %v478 = vld [vmem:[#allocation5 + $0x28] sm:$0xf]
        %v479 = vld [vmem:[#allocation5 + $0x2c] sm:$0xf]
        %v480 = vld [vmem:[#allocation5 + $0x30] sm:$0xf]
        %v481 = vld [vmem:[#allocation5 + $0x34] sm:$0xf]
        %v482 = vld [vmem:[#allocation5 + $0x38] sm:$0xf]
        %v483 = vld [vmem:[#allocation5 + $0x3c] sm:$0xf]
        %v484 = vld [vmem:[%s4] sm:$0x1]
        %v486 = vlaneseq
        %v487 = vshrl.u32 %v486, 7
        %v488 = vsub.s32 0, %v487
        %v489 = vrot.slane %v484, %v488
        %v507 = vunpack.c.l.b16 %v468
        %v508 = vunpack.c.l.b16 %v469
        %v509 = vunpack.c.l.b16 %v470
        %v510 = vunpack.c.l.b16 %v471
        %v511 = vunpack.c.l.b16 %v472
        %v512 = vunpack.c.l.b16 %v473
        %v513 = vunpack.c.l.b16 %v474
        %v514 = vunpack.c.l.b16 %v475
        %v515 = vunpack.c.l.b16 %v476
        %v516 = vunpack.c.l.b16 %v477
        %v517 = vunpack.c.l.b16 %v478
        %v518 = vunpack.c.l.b16 %v479
        %v519 = vunpack.c.l.b16 %v480
        %v520 = vunpack.c.l.b16 %v481
        %v521 = vunpack.c.l.b16 %v482
        %v522 = vunpack.c.l.b16 %v483
        %v523 = vpack.c.b16 %v508, %v507
        %v524 = vpack.c.b16 %v510, %v509
        %v525 = vpack.c.b16 %v512, %v511
        %v526 = vpack.c.b16 %v514, %v513
        %v527 = vpack.c.b16 %v516, %v515
        %v528 = vpack.c.b16 %v518, %v517
        %v529 = vpack.c.b16 %v520, %v519
        %v530 = vpack.c.b16 %v522, %v521
        %539 = vmatprep.subr.bf16.mxu0 0
        %540 = vmatpush1.bf16.msra.mxu0 %v523
        %541 = vmatprep.subr.bf16.mxu0 0
        %542 = vmatpush1.bf16.msra.mxu0 %v524
        %543 = vmatprep.subr.bf16.mxu0 0
        %544 = vmatpush1.bf16.msra.mxu0 %v525
        %545 = vmatprep.subr.bf16.mxu0 0
        %546 = vmatpush1.bf16.msra.mxu0 %v526
        %547 = vmatprep.subr.bf16.mxu0 0
        %548 = vmatpush1.bf16.msra.mxu0 %v527
        %549 = vmatprep.subr.bf16.mxu0 0
        %550 = vmatpush1.bf16.msra.mxu0 %v528
        %551 = vmatprep.subr.bf16.mxu0 0
        %552 = vmatpush1.bf16.msra.mxu0 %v529
        %553 = vmatprep.subr.bf16.mxu0 0
        %554 = vmatpush1.bf16.msra.mxu0 %v530
        %555 = vmatprep.subr.bf16.mxu0 0
        %556 = vmatpush1.bf16.msra.mxu0 0
        %557 = vmatprep.subr.bf16.mxu0 0
        %558 = vmatpush1.bf16.msra.mxu0 0
        %559 = vmatprep.subr.bf16.mxu0 0
        %560 = vmatpush1.bf16.msra.mxu0 0
        %561 = vmatprep.subr.bf16.mxu0 0
        %562 = vmatpush1.bf16.msra.mxu0 0
        %563 = vmatprep.subr.bf16.mxu0 0
        %564 = vmatpush1.bf16.msra.mxu0 0
        %565 = vmatprep.subr.bf16.mxu0 0
        %566 = vmatpush1.bf16.msra.mxu0 0
        %567 = vmatprep.subr.bf16.mxu0 0
        %568 = vmatpush1.bf16.msra.mxu0 0
        %569 = vmatprep.subr.bf16.mxu0 0
        %570 = vmatpush1.bf16.msra.mxu0 0
        %571 = vmatprep.mubr.bf16.mxu0 0
        %572 = vmatmul.mubr.bf16.gmra.mrb[0].mxu0 %v460
        %v573 = vpop.f32.mrb[0].mxu0
        %v574 = vadd.f32 %v489, %v573
        %v575 = vpop.f32.mrb[0].mxu0
        %v576 = vpop.f32.mrb[0].mxu0
        %v577 = vadd.f32 %v489, %v576
        %v578 = vpop.f32.mrb[0].mxu0
        %579 = vmatprep.mubr.bf16.mxu0 0
        %580 = vmatmul.mubr.bf16.gmra.mrb[0].mxu0 %v461
        %v581 = vpop.f32.mrb[0].mxu0
        %v582 = vadd.f32 %v489, %v581
        %v583 = vpop.f32.mrb[0].mxu0
        %v584 = vpop.f32.mrb[0].mxu0
        %v585 = vadd.f32 %v489, %v584
        %v586 = vpop.f32.mrb[0].mxu0
        %587 = vmatprep.mubr.bf16.mxu0 0
        %588 = vmatmul.mubr.bf16.gmra.mrb[0].mxu0 %v462
        %v589 = vpop.f32.mrb[0].mxu0
        %v590 = vadd.f32 %v489, %v589
        %v591 = vpop.f32.mrb[0].mxu0
        %v592 = vpop.f32.mrb[0].mxu0
        %v593 = vadd.f32 %v489, %v592
        %v594 = vpop.f32.mrb[0].mxu0
        %595 = vmatprep.mubr.bf16.mxu0 0
        %596 = vmatmul.mubr.bf16.gmra.mrb[0].mxu0 %v463
        %v597 = vpop.f32.mrb[0].mxu0
        %v598 = vadd.f32 %v489, %v597
        %v599 = vpop.f32.mrb[0].mxu0
        %v600 = vpop.f32.mrb[0].mxu0
        %v601 = vadd.f32 %v489, %v600
        %v602 = vpop.f32.mrb[0].mxu0
        %603 = vmatprep.mubr.bf16.mxu0 0
        %604 = vmatmul.mubr.bf16.gmra.mrb[0].mxu0 %v464
        %v605 = vpop.f32.mrb[0].mxu0
        %v606 = vadd.f32 %v489, %v605
        %v607 = vpop.f32.mrb[0].mxu0
        %v608 = vpop.f32.mrb[0].mxu0
        %v609 = vadd.f32 %v489, %v608
        %v610 = vpop.f32.mrb[0].mxu0
        %611 = vmatprep.mubr.bf16.mxu0 0
        %612 = vmatmul.mubr.bf16.gmra.mrb[0].mxu0 %v465
        %v613 = vpop.f32.mrb[0].mxu0
        %v614 = vadd.f32 %v489, %v613
        %v615 = vpop.f32.mrb[0].mxu0
        %v616 = vpop.f32.mrb[0].mxu0
        %v617 = vadd.f32 %v489, %v616
        %v618 = vpop.f32.mrb[0].mxu0
        %619 = vmatprep.mubr.bf16.mxu0 0
        %620 = vmatmul.mubr.bf16.gmra.mrb[0].mxu0 %v466
        %v621 = vpop.f32.mrb[0].mxu0
        %v622 = vadd.f32 %v489, %v621
        %v623 = vpop.f32.mrb[0].mxu0
        %v624 = vpop.f32.mrb[0].mxu0
        %v625 = vadd.f32 %v489, %v624
        %v626 = vpop.f32.mrb[0].mxu0
        %627 = vmatprep.mubr.bf16.mxu0 0
        %628 = vmatmul.mubr.bf16.gmra.mrb[0].mxu0 %v467
        %v629 = vpop.f32.mrb[0].mxu0
        %v630 = vadd.f32 %v489, %v629
        %v631 = vpop.f32.mrb[0].mxu0
        %v632 = vpop.f32.mrb[0].mxu0
        %v633 = vadd.f32 %v489, %v632
        %v634 = vpop.f32.mrb[0].mxu0
        %635 = vdwg.mxu0
        %v636 = vmax.f32 %v574, 0.0
        %v637 = vmax.f32 %v577, 0.0
        %v638 = vmax.f32 %v582, 0.0
        %v639 = vmax.f32 %v585, 0.0
        %v640 = vmax.f32 %v590, 0.0
        %v641 = vmax.f32 %v593, 0.0
        %v642 = vmax.f32 %v598, 0.0
        %v643 = vmax.f32 %v601, 0.0
        %v644 = vmax.f32 %v606, 0.0
        %v645 = vmax.f32 %v609, 0.0
        %v646 = vmax.f32 %v614, 0.0
        %v647 = vmax.f32 %v617, 0.0
        %v648 = vmax.f32 %v622, 0.0
        %v649 = vmax.f32 %v625, 0.0
        %v650 = vmax.f32 %v630, 0.0
        %v651 = vmax.f32 %v633, 0.0
        %v652 = vpack.c.bf16 %v637, %v636
        %v653 = vpack.c.bf16 %v639, %v638
        %v654 = vpack.c.bf16 %v641, %v640
        %v655 = vpack.c.bf16 %v643, %v642
        %v656 = vpack.c.bf16 %v645, %v644
        %v657 = vpack.c.bf16 %v647, %v646
        %v658 = vpack.c.bf16 %v649, %v648
        %v659 = vpack.c.bf16 %v651, %v650
        %v660 = vld [vmem:[#allocation7] sm:$0xf]
        %v661 = vld [vmem:[#allocation7 + $0x4] sm:$0xf]
        %v662 = vld [vmem:[#allocation7 + $0x8] sm:$0xf]
        %v663 = vld [vmem:[#allocation7 + $0xc] sm:$0xf]
        %v664 = vld [vmem:[#allocation7 + $0x10] sm:$0xf]
        %v665 = vld [vmem:[#allocation7 + $0x14] sm:$0xf]
        %v666 = vld [vmem:[#allocation7 + $0x18] sm:$0xf]
        %v667 = vld [vmem:[#allocation7 + $0x1c] sm:$0xf]
        %v668 = vld [vmem:[#allocation7 + $0x20] sm:$0xf]
        %v669 = vld [vmem:[#allocation7 + $0x24] sm:$0xf]
        %v670 = vld [vmem:[#allocation7 + $0x28] sm:$0xf]
        %v671 = vld [vmem:[#allocation7 + $0x2c] sm:$0xf]
        %v672 = vld [vmem:[#allocation7 + $0x30] sm:$0xf]
        %v673 = vld [vmem:[#allocation7 + $0x34] sm:$0xf]
        %v674 = vld [vmem:[#allocation7 + $0x38] sm:$0xf]
        %v675 = vld [vmem:[#allocation7 + $0x3c] sm:$0xf]
        %v676 = vld [vmem:[%s6] sm:$0x1]
        %v678 = vlaneseq
        %v679 = vshrl.u32 %v678, 7
        %v680 = vsub.s32 0, %v679
        %v681 = vrot.slane %v676, %v680
        %v699 = vunpack.c.l.b16 %v660
        %v700 = vunpack.c.l.b16 %v661
        %v701 = vunpack.c.l.b16 %v662
        %v702 = vunpack.c.l.b16 %v663
        %v703 = vunpack.c.l.b16 %v664
        %v704 = vunpack.c.l.b16 %v665
        %v705 = vunpack.c.l.b16 %v666
        %v706 = vunpack.c.l.b16 %v667
        %v707 = vunpack.c.l.b16 %v668
        %v708 = vunpack.c.l.b16 %v669
        %v709 = vunpack.c.l.b16 %v670
        %v710 = vunpack.c.l.b16 %v671
        %v711 = vunpack.c.l.b16 %v672
        %v712 = vunpack.c.l.b16 %v673
        %v713 = vunpack.c.l.b16 %v674
        %v714 = vunpack.c.l.b16 %v675
        %v715 = vpack.c.b16 %v700, %v699
        %v716 = vpack.c.b16 %v702, %v701
        %v717 = vpack.c.b16 %v704, %v703
        %v718 = vpack.c.b16 %v706, %v705
        %v719 = vpack.c.b16 %v708, %v707
        %v720 = vpack.c.b16 %v710, %v709
        %v721 = vpack.c.b16 %v712, %v711
        %v722 = vpack.c.b16 %v714, %v713
        %731 = vmatprep.subr.bf16.mxu0 0
        %732 = vmatpush1.bf16.msra.mxu0 %v715
        %733 = vmatprep.subr.bf16.mxu0 0
        %734 = vmatpush1.bf16.msra.mxu0 %v716
        %735 = vmatprep.subr.bf16.mxu0 0
        %736 = vmatpush1.bf16.msra.mxu0 %v717
        %737 = vmatprep.subr.bf16.mxu0 0
        %738 = vmatpush1.bf16.msra.mxu0 %v718
        %739 = vmatprep.subr.bf16.mxu0 0
        %740 = vmatpush1.bf16.msra.mxu0 %v719
        %741 = vmatprep.subr.bf16.mxu0 0
        %742 = vmatpush1.bf16.msra.mxu0 %v720
        %743 = vmatprep.subr.bf16.mxu0 0
        %744 = vmatpush1.bf16.msra.mxu0 %v721
        %745 = vmatprep.subr.bf16.mxu0 0
        %746 = vmatpush1.bf16.msra.mxu0 %v722
        %747 = vmatprep.subr.bf16.mxu0 0
        %748 = vmatpush1.bf16.msra.mxu0 0
        %749 = vmatprep.subr.bf16.mxu0 0
        %750 = vmatpush1.bf16.msra.mxu0 0
        %751 = vmatprep.subr.bf16.mxu0 0
        %752 = vmatpush1.bf16.msra.mxu0 0
        %753 = vmatprep.subr.bf16.mxu0 0
        %754 = vmatpush1.bf16.msra.mxu0 0
        %755 = vmatprep.subr.bf16.mxu0 0
        %756 = vmatpush1.bf16.msra.mxu0 0
        %757 = vmatprep.subr.bf16.mxu0 0
        %758 = vmatpush1.bf16.msra.mxu0 0
        %759 = vmatprep.subr.bf16.mxu0 0
        %760 = vmatpush1.bf16.msra.mxu0 0
        %761 = vmatprep.subr.bf16.mxu0 0
        %762 = vmatpush1.bf16.msra.mxu0 0
        %763 = vmatprep.mubr.bf16.mxu0 0
        %764 = vmatmul.mubr.bf16.gmra.mrb[0].mxu0 %v652
        %v765 = vpop.f32.mrb[0].mxu0
        %v766 = vadd.f32 %v681, %v765
        %v767 = vpop.f32.mrb[0].mxu0
        %v768 = vpop.f32.mrb[0].mxu0
        %v769 = vadd.f32 %v681, %v768
        %v770 = vpop.f32.mrb[0].mxu0
        %771 = vmatprep.mubr.bf16.mxu0 0
        %772 = vmatmul.mubr.bf16.gmra.mrb[0].mxu0 %v653
        %v773 = vpop.f32.mrb[0].mxu0
        %v774 = vadd.f32 %v681, %v773
        %v775 = vpop.f32.mrb[0].mxu0
        %v776 = vpop.f32.mrb[0].mxu0
        %v777 = vadd.f32 %v681, %v776
        %v778 = vpop.f32.mrb[0].mxu0
        %779 = vmatprep.mubr.bf16.mxu0 0
        %780 = vmatmul.mubr.bf16.gmra.mrb[0].mxu0 %v654
        %v781 = vpop.f32.mrb[0].mxu0
        %v782 = vadd.f32 %v681, %v781
        %v783 = vpop.f32.mrb[0].mxu0
        %v784 = vpop.f32.mrb[0].mxu0
        %v785 = vadd.f32 %v681, %v784
        %v786 = vpop.f32.mrb[0].mxu0
        %787 = vmatprep.mubr.bf16.mxu0 0
        %788 = vmatmul.mubr.bf16.gmra.mrb[0].mxu0 %v655
        %v789 = vpop.f32.mrb[0].mxu0
        %v790 = vadd.f32 %v681, %v789
        %v791 = vpop.f32.mrb[0].mxu0
        %v792 = vpop.f32.mrb[0].mxu0
        %v793 = vadd.f32 %v681, %v792
        %v794 = vpop.f32.mrb[0].mxu0
        %795 = vmatprep.mubr.bf16.mxu0 0
        %796 = vmatmul.mubr.bf16.gmra.mrb[0].mxu0 %v656
        %v797 = vpop.f32.mrb[0].mxu0
        %v798 = vadd.f32 %v681, %v797
        %v799 = vpop.f32.mrb[0].mxu0
        %v800 = vpop.f32.mrb[0].mxu0
        %v801 = vadd.f32 %v681, %v800
        %v802 = vpop.f32.mrb[0].mxu0
        %803 = vmatprep.mubr.bf16.mxu0 0
        %804 = vmatmul.mubr.bf16.gmra.mrb[0].mxu0 %v657
        %v805 = vpop.f32.mrb[0].mxu0
        %v806 = vadd.f32 %v681, %v805
        %v807 = vpop.f32.mrb[0].mxu0
        %v808 = vpop.f32.mrb[0].mxu0
        %v809 = vadd.f32 %v681, %v808
        %v810 = vpop.f32.mrb[0].mxu0
        %811 = vmatprep.mubr.bf16.mxu0 0
        %812 = vmatmul.mubr.bf16.gmra.mrb[0].mxu0 %v658
        %v813 = vpop.f32.mrb[0].mxu0
        %v814 = vadd.f32 %v681, %v813
        %v815 = vpop.f32.mrb[0].mxu0
        %v816 = vpop.f32.mrb[0].mxu0
        %v817 = vadd.f32 %v681, %v816
        %v818 = vpop.f32.mrb[0].mxu0
        %819 = vmatprep.mubr.bf16.mxu0 0
        %820 = vmatmul.mubr.bf16.gmra.mrb[0].mxu0 %v659
        %v821 = vpop.f32.mrb[0].mxu0
        %v822 = vadd.f32 %v681, %v821
        %v823 = vpop.f32.mrb[0].mxu0
        %v824 = vpop.f32.mrb[0].mxu0
        %v825 = vadd.f32 %v681, %v824
        %v826 = vpop.f32.mrb[0].mxu0
        %827 = vdwg.mxu0
        %v828 = vmax.f32 %v766, 0.0
        %v829 = vmax.f32 %v769, 0.0
        %v830 = vmax.f32 %v774, 0.0
        %v831 = vmax.f32 %v777, 0.0
        %v832 = vmax.f32 %v782, 0.0
        %v833 = vmax.f32 %v785, 0.0
        %v834 = vmax.f32 %v790, 0.0
        %v835 = vmax.f32 %v793, 0.0
        %v836 = vmax.f32 %v798, 0.0
        %v837 = vmax.f32 %v801, 0.0
        %v838 = vmax.f32 %v806, 0.0
        %v839 = vmax.f32 %v809, 0.0
        %v840 = vmax.f32 %v814, 0.0
        %v841 = vmax.f32 %v817, 0.0
        %v842 = vmax.f32 %v822, 0.0
        %v843 = vmax.f32 %v825, 0.0
        %v844 = vpack.c.bf16 %v829, %v828
        %v845 = vpack.c.bf16 %v831, %v830
        %v846 = vpack.c.bf16 %v833, %v832
        %v847 = vpack.c.bf16 %v835, %v834
        %v848 = vpack.c.bf16 %v837, %v836
        %v849 = vpack.c.bf16 %v839, %v838
        %v850 = vpack.c.bf16 %v841, %v840
        %v851 = vpack.c.bf16 %v843, %v842
        %v852 = vld [vmem:[#allocation8] sm:$0xf]
        %v853 = vld [vmem:[#allocation8 + $0x4] sm:$0xf]
        %v854 = vld [vmem:[#allocation8 + $0x8] sm:$0xf]
        %v855 = vld [vmem:[#allocation8 + $0xc] sm:$0xf]
        %v856 = vld [vmem:[#allocation8 + $0x10] sm:$0xf]
        %v857 = vld [vmem:[#allocation8 + $0x14] sm:$0xf]
        %v858 = vld [vmem:[#allocation8 + $0x18] sm:$0xf]
        %v859 = vld [vmem:[#allocation8 + $0x1c] sm:$0xf]
        %v860 = vld [vmem:[#allocation8 + $0x20] sm:$0xf]
        %v861 = vld [vmem:[#allocation8 + $0x24] sm:$0xf]
        %v862 = vld [vmem:[#allocation8 + $0x28] sm:$0xf]
        %v863 = vld [vmem:[#allocation8 + $0x2c] sm:$0xf]
        %v864 = vld [vmem:[#allocation8 + $0x30] sm:$0xf]
        %v865 = vld [vmem:[#allocation8 + $0x34] sm:$0xf]
        %v866 = vld [vmem:[#allocation8 + $0x38] sm:$0xf]
        %v867 = vld [vmem:[#allocation8 + $0x3c] sm:$0xf]
        %v868 = vld [vmem:[%s8] sm:$0x1]
        %v870 = vlaneseq
        %v871 = vshrl.u32 %v870, 7
        %v872 = vsub.s32 0, %v871
        %v873 = vrot.slane %v868, %v872
        %v891 = vunpack.c.l.b16 %v852
        %v892 = vunpack.c.l.b16 %v853
        %v893 = vunpack.c.l.b16 %v854
        %v894 = vunpack.c.l.b16 %v855
        %v895 = vunpack.c.l.b16 %v856
        %v896 = vunpack.c.l.b16 %v857
        %v897 = vunpack.c.l.b16 %v858
        %v898 = vunpack.c.l.b16 %v859
        %v899 = vunpack.c.l.b16 %v860
        %v900 = vunpack.c.l.b16 %v861
        %v901 = vunpack.c.l.b16 %v862
        %v902 = vunpack.c.l.b16 %v863
        %v903 = vunpack.c.l.b16 %v864
        %v904 = vunpack.c.l.b16 %v865
        %v905 = vunpack.c.l.b16 %v866
        %v906 = vunpack.c.l.b16 %v867
        %v907 = vpack.c.b16 %v892, %v891
        %v908 = vpack.c.b16 %v894, %v893
        %v909 = vpack.c.b16 %v896, %v895
        %v910 = vpack.c.b16 %v898, %v897
        %v911 = vpack.c.b16 %v900, %v899
        %v912 = vpack.c.b16 %v902, %v901
        %v913 = vpack.c.b16 %v904, %v903
        %v914 = vpack.c.b16 %v906, %v905
        %923 = vmatprep.subr.bf16.mxu0 0
        %924 = vmatpush1.bf16.msra.mxu0 %v907
        %925 = vmatprep.subr.bf16.mxu0 0
        %926 = vmatpush1.bf16.msra.mxu0 %v908
        %927 = vmatprep.subr.bf16.mxu0 0
        %928 = vmatpush1.bf16.msra.mxu0 %v909
        %929 = vmatprep.subr.bf16.mxu0 0
        %930 = vmatpush1.bf16.msra.mxu0 %v910
        %931 = vmatprep.subr.bf16.mxu0 0
        %932 = vmatpush1.bf16.msra.mxu0 %v911
        %933 = vmatprep.subr.bf16.mxu0 0
        %934 = vmatpush1.bf16.msra.mxu0 %v912
        %935 = vmatprep.subr.bf16.mxu0 0
        %936 = vmatpush1.bf16.msra.mxu0 %v913
        %937 = vmatprep.subr.bf16.mxu0 0
        %938 = vmatpush1.bf16.msra.mxu0 %v914
        %939 = vmatprep.subr.bf16.mxu0 0
        %940 = vmatpush1.bf16.msra.mxu0 0
        %941 = vmatprep.subr.bf16.mxu0 0
        %942 = vmatpush1.bf16.msra.mxu0 0
        %943 = vmatprep.subr.bf16.mxu0 0
        %944 = vmatpush1.bf16.msra.mxu0 0
        %945 = vmatprep.subr.bf16.mxu0 0
        %946 = vmatpush1.bf16.msra.mxu0 0
        %947 = vmatprep.subr.bf16.mxu0 0
        %948 = vmatpush1.bf16.msra.mxu0 0
        %949 = vmatprep.subr.bf16.mxu0 0
        %950 = vmatpush1.bf16.msra.mxu0 0
        %951 = vmatprep.subr.bf16.mxu0 0
        %952 = vmatpush1.bf16.msra.mxu0 0
        %953 = vmatprep.subr.bf16.mxu0 0
        %954 = vmatpush1.bf16.msra.mxu0 0
        %955 = vmatprep.mubr.bf16.mxu0 0
        %956 = vmatmul.mubr.bf16.gmra.mrb[0].mxu0 %v844
        %v957 = vpop.f32.mrb[0].mxu0
        %v958 = vadd.f32 %v873, %v957
        %v959 = vpop.f32.mrb[0].mxu0
        %v960 = vpop.f32.mrb[0].mxu0
        %v961 = vadd.f32 %v873, %v960
        %v962 = vpop.f32.mrb[0].mxu0
        %963 = vmatprep.mubr.bf16.mxu0 0
        %964 = vmatmul.mubr.bf16.gmra.mrb[0].mxu0 %v845
        %v965 = vpop.f32.mrb[0].mxu0
        %v966 = vadd.f32 %v873, %v965
        %v967 = vpop.f32.mrb[0].mxu0
        %v968 = vpop.f32.mrb[0].mxu0
        %v969 = vadd.f32 %v873, %v968
        %v970 = vpop.f32.mrb[0].mxu0
        %971 = vmatprep.mubr.bf16.mxu0 0
        %972 = vmatmul.mubr.bf16.gmra.mrb[0].mxu0 %v846
        %v973 = vpop.f32.mrb[0].mxu0
        %v974 = vadd.f32 %v873, %v973
        %v975 = vpop.f32.mrb[0].mxu0
        %v976 = vpop.f32.mrb[0].mxu0
        %v977 = vadd.f32 %v873, %v976
        %v978 = vpop.f32.mrb[0].mxu0
        %979 = vmatprep.mubr.bf16.mxu0 0
        %980 = vmatmul.mubr.bf16.gmra.mrb[0].mxu0 %v847
        %v981 = vpop.f32.mrb[0].mxu0
        %v982 = vadd.f32 %v873, %v981
        %v983 = vpop.f32.mrb[0].mxu0
        %v984 = vpop.f32.mrb[0].mxu0
        %v985 = vadd.f32 %v873, %v984
        %v986 = vpop.f32.mrb[0].mxu0
        %987 = vmatprep.mubr.bf16.mxu0 0
        %988 = vmatmul.mubr.bf16.gmra.mrb[0].mxu0 %v848
        %v989 = vpop.f32.mrb[0].mxu0
        %v990 = vadd.f32 %v873, %v989
        %v991 = vpop.f32.mrb[0].mxu0
        %v992 = vpop.f32.mrb[0].mxu0
        %v993 = vadd.f32 %v873, %v992
        %v994 = vpop.f32.mrb[0].mxu0
        %995 = vmatprep.mubr.bf16.mxu0 0
        %996 = vmatmul.mubr.bf16.gmra.mrb[0].mxu0 %v849
        %v997 = vpop.f32.mrb[0].mxu0
        %v998 = vadd.f32 %v873, %v997
        %v999 = vpop.f32.mrb[0].mxu0
        %v1000 = vpop.f32.mrb[0].mxu0
        %v1001 = vadd.f32 %v873, %v1000
        %v1002 = vpop.f32.mrb[0].mxu0
        %1003 = vmatprep.mubr.bf16.mxu0 0
        %1004 = vmatmul.mubr.bf16.gmra.mrb[0].mxu0 %v850
        %v1005 = vpop.f32.mrb[0].mxu0
        %v1006 = vadd.f32 %v873, %v1005
        %v1007 = vpop.f32.mrb[0].mxu0
        %v1008 = vpop.f32.mrb[0].mxu0
        %v1009 = vadd.f32 %v873, %v1008
        %v1010 = vpop.f32.mrb[0].mxu0
        %1011 = vmatprep.mubr.bf16.mxu0 0
        %1012 = vmatmul.mubr.bf16.gmra.mrb[0].mxu0 %v851
        %v1013 = vpop.f32.mrb[0].mxu0
        %v1014 = vadd.f32 %v873, %v1013
        %v1015 = vpop.f32.mrb[0].mxu0
        %v1016 = vpop.f32.mrb[0].mxu0
        %v1017 = vadd.f32 %v873, %v1016
        %v1018 = vpop.f32.mrb[0].mxu0
        %1019 = vdwg.mxu0
        %v1020 = vmax.f32 %v958, 0.0
        %v1021 = vmax.f32 %v961, 0.0
        %v1022 = vmax.f32 %v966, 0.0
        %v1023 = vmax.f32 %v969, 0.0
        %v1024 = vmax.f32 %v974, 0.0
        %v1025 = vmax.f32 %v977, 0.0
        %v1026 = vmax.f32 %v982, 0.0
        %v1027 = vmax.f32 %v985, 0.0
        %v1028 = vmax.f32 %v990, 0.0
        %v1029 = vmax.f32 %v993, 0.0
        %v1030 = vmax.f32 %v998, 0.0
        %v1031 = vmax.f32 %v1001, 0.0
        %v1032 = vmax.f32 %v1006, 0.0
        %v1033 = vmax.f32 %v1009, 0.0
        %v1034 = vmax.f32 %v1014, 0.0
        %v1035 = vmax.f32 %v1017, 0.0
        %1036 = vst [vmem:[%s394] sm:$0xff] %v1020
        %1037 = vst [vmem:[%s394 + $0x8] sm:$0xff] %v1021
        %1038 = vst [vmem:[%s394 + $0x10] sm:$0xff] %v1022
        %1039 = vst [vmem:[%s394 + $0x18] sm:$0xff] %v1023
        %1040 = vst [vmem:[%s394 + $0x20] sm:$0xff] %v1024
        %1041 = vst [vmem:[%s394 + $0x28] sm:$0xff] %v1025
        %1042 = vst [vmem:[%s394 + $0x30] sm:$0xff] %v1026
        %1043 = vst [vmem:[%s394 + $0x38] sm:$0xff] %v1027
        %1044 = vst [vmem:[%s394 + $0x40] sm:$0xff] %v1028
        %1045 = vst [vmem:[%s394 + $0x48] sm:$0xff] %v1029
        %1046 = vst [vmem:[%s394 + $0x50] sm:$0xff] %v1030
        %1047 = vst [vmem:[%s394 + $0x58] sm:$0xff] %v1031
        %1048 = vst [vmem:[%s394 + $0x60] sm:$0xff] %v1032
        %1049 = vst [vmem:[%s394 + $0x68] sm:$0xff] %v1033
        %1050 = vst [vmem:[%s394 + $0x70] sm:$0xff] %v1034
        %1051 = vst [vmem:[%s394 + $0x78] sm:$0xff] %v1035
        %s1052 = sand.u32 %s230, 1
        %s1053 = scalar_lea.sflag [#allocation4], %s1052
        %s1054 = sand.u32 %s230, 1
        %s1055 = smul.addr %s1054, 128
        %s1056 = scalar_lea.vmem [#allocation10], %s1055
        // Predicated region
        $region73: #{tpu_custom_call.1} parent=55 // pred_check
          %p1057 = pneg %p240
        $region74: #{tpu_custom_call.1} parent=55 // pred_check_branch
          %1059 = sbr.rel (%p1057) target = $region76
        $region75: #{tpu_custom_call.1} parent=55 // pred_region
          %s1060 = smul.u32 16, %s28
          %s1062 = ssub.s32 2048, 2048
          %1063 = vsyncadd %s1053, %s1062
          %s1064 = smul.addr %s1060, 128
          %s1065 = scalar_lea.hbm %s9, %s1064
          %s1066 = sshll.u32 %s1056, 4
          %s1067 = int_to_ptr.vmem [resolvable:$true] %s1066
          %1072 = dma.vmem_to_hbm [thread:$0]  %s1067, 2048, %s1065, %s1053, 128, 128, 8
        $region76: #{tpu_custom_call.1} parent=55 // pred_fallthru
          _
      $region56: #{tpu_custom_call.1} parent=5 // pred_fallthru
        _
      %p1073 = scmp.le.s32.totalorder 2, %s23
      // Predicated region
      $region77: #{tpu_custom_call.1} parent=5 // pred_check
        %p1074 = pneg %p1073
      $region78: #{tpu_custom_call.1} parent=5 // pred_check_branch
        %1076 = sbr.rel (%p1074) target = $region80
      $region79: #{tpu_custom_call.1} parent=5 // pred_region
        %s1077 = ssub.s32 %s23, 2
        // Predicated region
        $region81: #{tpu_custom_call.1} parent=79 // pred_check
          %p1078 = pneg %p246
        $region82: #{tpu_custom_call.1} parent=79 // pred_check_branch
          %1080 = sbr.rel (%p1078) target = $region84
        $region83: #{tpu_custom_call.1} parent=79 // pred_region
          %s1081 = sand.u32 %s231, 1
          %s1082 = scalar_lea.sflag [#allocation4], %s1081
          %s1083 = sand.u32 %s231, 1
          %s1084 = smul.addr %s1083, 128
          %s1085 = scalar_lea.vmem [#allocation10], %s1084
          %1086 = dma.done %s1082, 2048
        $region84: #{tpu_custom_call.1} parent=79 // pred_fallthru
          _
      $region80: #{tpu_custom_call.1} parent=5 // pred_fallthru
        _
    $region6: #{tpu_custom_call.1} parent=1 // loop_footer
      %s27 = sadd.s32 1, %s23
    $region7: #{tpu_custom_call.1} parent=1 // loop_footer_branch
      %22 = sbr.rel target = $region3
    $region8: #{tpu_custom_call.1} parent=1 // loop_exit
      _
    %1087 = vsyncpa [#allocation3], 1
    %s1088 = scalar_lea.sflag [#allocation3], 1
    %1089 = vsyncpa %s1088, 1
    %1090 = vsyncpa [#allocation6], 1
    %1091 = vsyncpa [#allocation9], 1
    %1092 = vsyncpa [#allocation4], 1
    %s1093 = scalar_lea.sflag [#allocation4], 1
    %1094 = vsyncpa %s1093, 1

</llo_original>
